<compile_context>
chip_gen: v6e
topology: v6e:2x2x1
jax: 0.10.0
libtpu: 0.0.40
codegen_flags: <defaults>
</compile_context>

<pallas_src>
import jax
import jax.numpy as jnp
from jax.experimental import pallas as pl
from jax.experimental.pallas import tpu as pltpu


def _cos_kernel(x_ref, o_ref):
    o_ref[...] = jnp.cos(x_ref[...])


def _sublane_pack(dtype) -> int:
    # Native sublane packing: (8,128) f32, (16,128) bf16/f16, (32,128) int8/fp8.
    itemsize = jnp.dtype(dtype).itemsize
    return {4: 8, 2: 16, 1: 32}.get(itemsize, 8)


def _cos_2d(x2d: jax.Array) -> jax.Array:
    """Elementwise cos over a (rows, lane) slab where lane % 128 == 0."""
    rows, lane = x2d.shape
    itemsize = jnp.dtype(x2d.dtype).itemsize
    pack = _sublane_pack(x2d.dtype)

    # ~2 MiB per buffer: large enough to amortize per-step DMA/loop overhead
    # (measured streaming kernels hit ~85% of HBM roofline at ~1-4 MiB tiles),
    # small enough that input+output double-buffered (~4x block) stays ~8 MiB.
    target_block_bytes = 2 * 1024 * 1024
    block_rows = max(pack, (target_block_bytes // (lane * itemsize)) // pack * pack)
    if block_rows >= rows:
        block_rows = rows  # full extent along sublane dim is always legal

    grid = (pl.cdiv(rows, block_rows),)

    block_bytes = block_rows * lane * itemsize
    resident = 4 * block_bytes  # in + out, 2 pipeline buffers each
    vmem_limit = int(min(max(2 * resident, 8 << 20), 32 << 20))

    return pl.pallas_call(
        _cos_kernel,
        out_shape=jax.ShapeDtypeStruct((rows, lane), x2d.dtype),
        grid_spec=pltpu.PrefetchScalarGridSpec(
            num_scalar_prefetch=0,
            grid=grid,
            in_specs=[pl.BlockSpec((block_rows, lane), lambda i: (i, 0))],
            out_specs=pl.BlockSpec((block_rows, lane), lambda i: (i, 0)),
        ),
        compiler_params=pltpu.CompilerParams(
            dimension_semantics=("parallel",),
            vmem_limit_bytes=vmem_limit,
        ),
    )(x2d)


def cos_layer(x: jax.Array) -> jax.Array:
    """Elementwise cosine, matching torch.cos(x) semantics (shape/dtype preserved)."""
    orig_shape = x.shape
    n = x.size
    if n == 0:
        return x

    flat = x.reshape(-1)

    # Fast path: pick the widest lane width that evenly divides n, so we can
    # reshape directly into a lane-dense slab with no padding and no trailing
    # slice (each of those would cost a full extra HBM read+write).
    lane = 0
    for cand in (1024, 512, 256, 128):
        if n % cand == 0:
            lane = cand
            break

    if lane:
        return _cos_2d(flat.reshape(n // lane, lane)).reshape(orig_shape)

    # Ragged size: run the bulk (multiple of 128) through the kernel and the
    # tiny (<128 element) tail through plain jnp.cos, instead of padding and
    # slicing the whole tensor.
    main = (n // 128) * 128
    if main == 0:
        return jnp.cos(x)
    head = _cos_2d(flat[:main].reshape(main // 128, 128)).reshape(-1)
    tail = jnp.cos(flat[main:])
    return jnp.concatenate([head, tail]).reshape(orig_shape)


if __name__ == "__main__":
    key = jax.random.PRNGKey(0)

    # nnodely-style input: (batch, window, features) — divisible fast path.
    x = jax.random.normal(key, (2, 8, 32), dtype=jnp.float32)
    y = cos_layer(x)
    jax.block_until_ready(y)
    ref = jnp.cos(x)
    assert y.shape == x.shape and y.dtype == x.dtype
    assert jnp.allclose(y, ref, atol=1e-6, rtol=1e-6)

    # Ragged size (455 elements) — exercises kernel bulk + jnp.cos tail path.
    key2 = jax.random.PRNGKey(1)
    xr = jax.random.normal(key2, (5, 7, 13), dtype=jnp.float32)
    yr = cos_layer(xr)
    jax.block_until_ready(yr)
    assert yr.shape == xr.shape and yr.dtype == xr.dtype
    assert jnp.allclose(yr, jnp.cos(xr), atol=1e-6, rtol=1e-6)

    print("KERNEL_OK")
</pallas_src>

<mosaic_0001>
module attributes {stable_mosaic.version = 11 : i64} {
  func.func @_cos_kernel(%arg0: i32, %arg1: memref<1x512xf32, #tpu.memory_space<vmem>>, %arg2: memref<1x512xf32, #tpu.memory_space<vmem>>) attributes {dimension_semantics = [#tpu.dimension_semantics<parallel>], iteration_bounds = array<i64: 1>, scalar_prefetch = 0 : i64, scratch_operands = 0 : i64, tpu.core_type = #tpu.core_type<tc>, window_params = [{transform_indices = @transform_0, window_bounds = array<i64: 1, 512>}, {transform_indices = @transform_1, window_bounds = array<i64: 1, 512>}]} {
    %c0 = arith.constant 0 : index
    %c0_0 = arith.constant 0 : index
    %0 = vector.load %arg1[%c0, %c0_0] : memref<1x512xf32, #tpu.memory_space<vmem>>, vector<1x512xf32>
    %1 = math.cos %0 : vector<1x512xf32>
    %c0_1 = arith.constant 0 : index
    %c0_2 = arith.constant 0 : index
    %2 = vector.load %arg2[%c0_1, %c0_2] : memref<1x512xf32, #tpu.memory_space<vmem>>, vector<1x512xf32>
    tpu.vector_store %arg2[%c0_1, %c0_2], %1 {strides = array<i32>} : memref<1x512xf32, #tpu.memory_space<vmem>>, vector<1x512xf32>,
    return
  }
  func.func @transform_0(%arg0: i32) -> (i32, i32) {
    %c0_i32 = arith.constant 0 : i32
    %c0_i32_0 = arith.constant 0 : i32
    return %arg0, %c0_i32 : i32, i32
  }
  func.func @transform_1(%arg0: i32) -> (i32, i32) {
    %c0_i32 = arith.constant 0 : i32
    %c0_i32_0 = arith.constant 0 : i32
    return %arg0, %c0_i32 : i32, i32
  }
}

</mosaic_0001>

<llo_original>
// kernel: tpu_custom_call.1
$region0: #{tpu_custom_call.1}
  #allocation0 [shape = 'u32[]', space=smem, size = 0x4, offset = 0x4, fixed_abs, tag = 'smem constant byte address 0x4 - core index']
  #allocation1 [shape = 'u32[144,128]{1,0:T(1,128)}', space=vmem, size = 0x12000, scoped, tag = 'internal scratch']
  %s0 = inlined_call_operand.hbm [shape: f32[1,512], index: 0, kind: input, shape index: {}]
  %s1 = inlined_call_operand.hbm [shape: f32[1,512], index: 1, kind: output, shape index: {}]
  %s2 = sld [smem:[#allocation0]]
  $region18: #{tpu_custom_call.1} parent=0
    _
  %s4 = ssub.s32 1, %s2
  %s5 = scalar_select 0, %s4, %s2
  $region1: #{tpu_custom_call.1} parent=0
    #allocation2 [shape = 'u8[2048]{0}', space=vmem, size = 0x800, scoped, tag = 'input window, operand 0, single buffered']
    #allocation3 [shape = 's32[1]{0}', space=sflag, size = 0x4, scoped, tag = 'scoped memory for tpu_custom_call.1']
    #allocation4 [shape = 's32[1]{0}', space=sflag, size = 0x4, scoped, tag = 'scoped memory for tpu_custom_call.1']
    #allocation5 [shape = 'u8[2048]{0}', space=vmem, size = 0x800, scoped, tag = 'output window, operand 0, single buffered']
    %6 = vsyncpa [#allocation3], 0
    %7 = vsyncpa [#allocation4], 0
    // Predicated region
    $region2: #{tpu_custom_call.1} parent=1 // pred_check
      _
    $region3: #{tpu_custom_call.1} parent=1 // pred_check_branch
      %9 = sbr.rel (0) target = $region5
    $region4: #{tpu_custom_call.1} parent=1 // pred_region
      %s11 = ssub.s32 64, 64
      %12 = vsyncadd [#allocation3], %s11
      %s14 = sshll.u32 [#allocation2], 4
      %s15 = int_to_ptr.vmem [resolvable:$true] %s14
      %17 = dma.hbm_to_vmem [thread:$0]  %s0, 64, %s15, [#allocation3]
    $region5: #{tpu_custom_call.1} parent=1 // pred_fallthru
      _
    // Predicated region
    $region6: #{tpu_custom_call.1} parent=1 // pred_check
      _
    $region7: #{tpu_custom_call.1} parent=1 // pred_check_branch
      %19 = sbr.rel (0) target = $region9
    $region8: #{tpu_custom_call.1} parent=1 // pred_region
      %20 = dma.done [#allocation3], 64
    $region9: #{tpu_custom_call.1} parent=1 // pred_fallthru
      _
    %v21 = vld [vmem:[#allocation2] sm:$0xf]
    %v22 = vand.u32 2147483647, %v21
    %vm23 = vcmp.le.f32.partialorder %v22, 0.7853982
    %vm24 = vcmp.lt.s32.totalorder %v21, 0
    %v25 = vand.u32 %v21, 2139095040
    %v26 = vshrl.u32 %v25, 23
    %v27 = vsub.s32 %v26, 127
    %v28 = vand.u32 2147483647, %v21
    %v29 = vand.u32 %v28, 8388607
    %v30 = vor.u32 %v29, 8388608
    %v31 = vsub.s32 0, %v30
    %v32 = vadd.s32 %v27, 1
    %vm33 = vcmp.gt.s32.totalorder %v32, 0
    %v34 = vsel %vm33, %v32, 0
    %v35 = vshrl.u32 %v34, 5
    %v36 = vand.u32 %v34, 31
    %v37 = vsub.s32 32, %v36
    %v38 = vshrl.u32 683565275, %v37
    %v39 = vshll.u32 683565275, %v36
    %v40 = vshrl.u32 2475754826, %v37
    %v41 = vor.u32 %v39, %v40
    %v42 = vshll.u32 2475754826, %v36
    %v43 = vshrl.u32 2131351028, %v37
    %v44 = vor.u32 %v42, %v43
    %v45 = vshll.u32 2131351028, %v36
    %v46 = vshrl.u32 2102212464, %v37
    %v47 = vor.u32 %v45, %v46
    %v48 = vshll.u32 2102212464, %v36
    %v49 = vshrl.u32 920167782, %v37
    %v50 = vor.u32 %v48, %v49
    %v51 = vshll.u32 920167782, %v36
    %v52 = vshrl.u32 1326507024, %v37
    %v53 = vor.u32 %v51, %v52
    %vm54 = vcmp.lt.s32.totalorder %v35, 1
    %vm55 = vcmp.lt.s32.totalorder %v35, 2
    %vm56 = vcmp.lt.s32.totalorder %v35, 3
    %vm57 = vcmp.lt.s32.totalorder %v35, 4
    %v58 = vsel %vm54, %v38, %v41
    %v59 = vsel %vm57, %v47, 2102212464
    %v60 = vsel %vm56, %v44, %v59
    %v61 = vsel %vm55, %v58, %v60
    %v62 = vsel %vm54, %v41, %v44
    %v63 = vsel %vm57, %v50, 920167782
    %v64 = vsel %vm56, %v47, %v63
    %v65 = vsel %vm55, %v62, %v64
    %v66 = vsel %vm54, %v44, %v47
    %v67 = vsel %vm57, %v53, 1326507024
    %v68 = vsel %vm56, %v50, %v67
    %v69 = vsel %vm55, %v66, %v68
    %v70 = vshll.u32 %v30, 8
    %v71 = vmul.u32.u64.compose %v70, %v69
    %v72 = vextract.low.u32 %v71
    %v73 = vextract.high.u32 %v71
    %v74 = vmul.u32.u64.compose %v70, %v65
    %v75 = vextract.low.u32 %v74
    %v76 = vextract.high.u32 %v74
    %v77 = vmul.u32 %v70, %v61
    %v78 = vadd.s32 %v73, %v75
    %vm79 = vc.u32 %v73, %v75
    %v80 = vadd.s32 %v76, 1
    %v81 = vsel %vm79, %v80, %v76
    %v82 = vadd.s32 %v77, %v81
    %v83 = vadd.s32 %v82, 536870912
    %v84 = vshrl.u32 %v83, 30
    %v85 = vshll.u32 %v84, 30
    %v86 = vsub.s32 %v82, %v85
    %vm87 = vcmp.lt.s32.totalorder %v86, 0
    %v88 = vsub.s32 0, %v86
    %v89 = vsel %vm87, %v88, %v86
    %v90 = vclz %v89
    %v91 = vsub.s32 %v90, 2
    %vm92 = vcmp.gt.s32.totalorder 0, %v91
    %v93 = vsel %vm92, 0, %v91
    %v94 = vsub.s32 32, %v93
    %v95 = vshll.u32 %v86, %v93
    %v96 = vshrl.u32 %v78, %v94
    %v97 = vor.u32 %v95, %v96
    %v98 = vsub.s32 4294967266, %v93
    %v99 = vadd.s32 %v98, 127
    %v100 = vshll.u32 %v99, 23
    %v101 = vor.u32 4788187, %v100
    %v102 = vand.u32 2147483647, %v101
    %v104 = vcvt.s32.f32 %v97
    %v105 = vmul.f32 %v104, %v102
    %v106 = vxor.u32 %v105, 2147483648
    %v107 = vsel %vm24, %v106, %v105
    %v108 = vsub.s32 4, %v84
    %v109 = vsel %vm24, %v108, %v84
    %v110 = vsel %vm23, %v21, %v107
    %v111 = vsel %vm23, 0, %v109
    %v112 = vcosq.f32.pop %v110
    %v113 = vsinq.f32.pop %v110
    %vm114 = vweird.f32 %v21
    %v115 = vand.u32 %v111, 3
    %vm116 = vcmp.lt.s32.totalorder %v115, 2
    %vm117 = vcmp.eq.s32.totalorder %v115, 0
    %v118 = vxor.u32 %v113, 2147483648
    %v119 = vsel %vm117, %v112, %v118
    %vm120 = vcmp.eq.s32.totalorder %v115, 2
    %v121 = vxor.u32 %v112, 2147483648
    %v122 = vsel %vm120, %v121, %v113
    %v123 = vsel %vm116, %v119, %v122
    %v124 = vsel %vm114, nan, %v123
    %v125 = vlaneseq
    %vm126 = vcmp.ge.s32.totalorder %v125, 0
    %vm127 = vcmp.lt.s32.totalorder %v125, 512
    %vm128 = vmand %vm126, %vm127
    %129 = vst.msk [vmem:[#allocation5] sm:$0xf] %vm128, %v124
    // Predicated region
    $region10: #{tpu_custom_call.1} parent=1 // pred_check
      _
    $region11: #{tpu_custom_call.1} parent=1 // pred_check_branch
      %131 = sbr.rel (0) target = $region13
    $region12: #{tpu_custom_call.1} parent=1 // pred_region
      %s133 = ssub.s32 64, 64
      %134 = vsyncadd [#allocation4], %s133
      %s136 = sshll.u32 [#allocation5], 4
      %s137 = int_to_ptr.vmem [resolvable:$true] %s136
      %139 = dma.vmem_to_hbm [thread:$0]  %s137, 64, %s1, [#allocation4]
    $region13: #{tpu_custom_call.1} parent=1 // pred_fallthru
      _
    // Predicated region
    $region14: #{tpu_custom_call.1} parent=1 // pred_check
      _
    $region15: #{tpu_custom_call.1} parent=1 // pred_check_branch
      %141 = sbr.rel (0) target = $region17
    $region16: #{tpu_custom_call.1} parent=1 // pred_region
      %142 = dma.done [#allocation4], 64
    $region17: #{tpu_custom_call.1} parent=1 // pred_fallthru
      _
    %143 = vsyncpa [#allocation3], 1
    %144 = vsyncpa [#allocation4], 1

</llo_original>
